<compile_context>
chip_gen: v6e
topology: v6e:2x2x1
jax: 0.10.0
libtpu: 0.0.40
codegen_flags: <defaults>
</compile_context>

<pallas_src>
import jax
import jax.numpy as jnp
from jax.experimental import pallas as pl
from jax.experimental.pallas import tpu as pltpu

_LANES = 128           # vreg lane width: last dim must be lane-dense
_MAX_TILE_ROWS = 2048  # rows per grid step (2048*128*4 B = 1 MiB per buffer)
_MIN_SPLIT_ROWS = 64   # above this, force >= 2 grid steps (v7x megacore)


def _round_up(x, m):
    return ((x + m - 1) // m) * m


def _make_kernel(n, n_pow2):
    """Builds the gather kernel for a table padded to n_pow2 entries."""
    n_bits = n_pow2.bit_length() - 1   # log2(n_pow2)

    def kernel(idx_ref, table_ref, out_ref):
        # idx_ref:   (TM, 128) int32   VMEM (lane-dense indices)
        # table_ref: (n_pow2,) float32 SMEM (sigmoid(alpha), padded to pow2)
        # out_ref:   (TM, 128) float32 VMEM
        idx = idx_ref[...]
        # Clamp in-kernel (2 VPU ops) instead of a wrapper-side HBM pass.
        # Keeps the gather memory-safe; PyTorch would raise on OOB instead.
        idx = jnp.clip(idx, 0, n - 1)

        # One boolean mask per index bit; reused across the whole tournament.
        bits = [(idx & (1 << b)) != 0 for b in range(n_bits)]

        def tree(lo, size):
            # Gathers table entries [lo, lo+size) keyed on bits[0:log2(size)].
            if size == 2:
                return jnp.where(bits[0], table_ref[lo + 1], table_ref[lo])
            half = size // 2
            level = size.bit_length() - 2          # log2(size) - 1
            left = tree(lo, half)                  # depth-first: short live
            right = tree(lo + half, half)          # ranges for temporaries
            return jnp.where(bits[level], right, left)

        out_ref[...] = tree(0, n_pow2)

    return kernel


def attention_params_forward(alpha, idx):
    """probs = sigmoid(alpha[idx]); alpha: (N,) f32, idx: any int shape."""
    n = int(alpha.shape[0])
    n_pow2 = max(2, 1 << (n - 1).bit_length())     # pow2-padded table length
    idx_shape = idx.shape

    # Hoist the sigmoid onto the N-entry table (bit-exact vs sigmoid-of-gather).
    table = jax.nn.sigmoid(alpha.astype(jnp.float32))
    if n_pow2 != n:
        table = jnp.pad(table, (0, n_pow2 - n))    # never selected (idx clamped)

    idx_flat = idx.reshape(-1).astype(jnp.int32)   # no-op for int32 inputs
    m = idx_flat.shape[0]

    rows = -(-m // _LANES)                         # ceil(M / 128)
    rows8 = _round_up(max(rows, 1), 8)             # sublane-aligned row count
    tm = min(rows8, _MAX_TILE_ROWS)
    if tm == rows8 and rows8 >= _MIN_SPLIT_ROWS:
        # Keep >= 2 grid steps so the v7x megacore has work for both cores.
        tm = _round_up(-(-rows8 // 2), 8)
    rows_padded = _round_up(rows8, tm)             # grid divides evenly
    total = rows_padded * _LANES

    if total != m:                                 # pad only when needed
        idx_flat = jnp.pad(idx_flat, (0, total - m))
    idx_2d = idx_flat.reshape(rows_padded, _LANES)

    out = pl.pallas_call(
        _make_kernel(n, n_pow2),
        out_shape=jax.ShapeDtypeStruct((rows_padded, _LANES), jnp.float32),
        grid=(rows_padded // tm,),
        in_specs=[
            pl.BlockSpec((tm, _LANES), lambda i: (i, 0)),
            pl.BlockSpec(memory_space=pltpu.MemorySpace.SMEM),  # table, untiled
        ],
        out_specs=pl.BlockSpec((tm, _LANES), lambda i: (i, 0)),
        compiler_params=pltpu.CompilerParams(
            dimension_semantics=("parallel",),     # rows shard across TCs
            vmem_limit_bytes=32 * 1024 * 1024),
    )(idx_2d, table)

    out_flat = out.reshape(-1)
    if total != m:
        out_flat = out_flat[:m]                    # slice only if we padded
    return out_flat.reshape(idx_shape)


if __name__ == "__main__":
    key = jax.random.PRNGKey(0)
    k_alpha, k_idx = jax.random.split(key)

    N = 32          # parameter length (module: alpha = nn.Parameter(zeros(N)))
    B, S = 2, 8     # index tensor shape

    # Deterministic synthetic parameter values (module default is zeros, which
    # would make the gather untestable; use a seeded init instead).
    alpha = jax.random.normal(k_alpha, (N,), dtype=jnp.float32)
    idx = jax.random.randint(k_idx, (B, S), minval=0, maxval=N, dtype=jnp.int32)

    probs = attention_params_forward(alpha, idx)
    jax.block_until_ready(probs)

    # Reference check against plain JAX gather + sigmoid.
    ref = jax.nn.sigmoid(alpha[idx])
    assert probs.shape == idx.shape
    assert jnp.allclose(probs, ref, atol=1e-6), (probs, ref)

    # Larger check: multi-step grid, no-padding fast path (m % 128 == 0).
    idx_big = jax.random.randint(jax.random.PRNGKey(1), (3, 4096),
                                 minval=0, maxval=N, dtype=jnp.int32)
    probs_big = attention_params_forward(alpha, idx_big)
    jax.block_until_ready(probs_big)
    ref_big = jax.nn.sigmoid(alpha[idx_big])
    assert jnp.allclose(probs_big, ref_big, atol=1e-6)

    # Non-power-of-two N + ragged length (pads both the table and the tile).
    alpha27 = jax.random.normal(jax.random.PRNGKey(2), (27,), dtype=jnp.float32)
    idx27 = jax.random.randint(jax.random.PRNGKey(3), (5, 100),
                               minval=0, maxval=27, dtype=jnp.int32)
    probs27 = attention_params_forward(alpha27, idx27)
    jax.block_until_ready(probs27)
    assert jnp.allclose(probs27, jax.nn.sigmoid(alpha27[idx27]), atol=1e-6)

    print("KERNEL_OK")
</pallas_src>

<mosaic_0001>
module attributes {stable_mosaic.version = 11 : i64} {
  func.func @kernel(%arg0: i32, %arg1: memref<8x128xi32, #tpu.memory_space<vmem>>, %arg2: memref<32xf32, #tpu.memory_space<smem>>, %arg3: memref<8x128xf32, #tpu.memory_space<vmem>>) attributes {dimension_semantics = [#tpu.dimension_semantics<parallel>], iteration_bounds = array<i64: 1>, scalar_prefetch = 0 : i64, scratch_operands = 0 : i64, tpu.core_type = #tpu.core_type<tc>, window_params = [{transform_indices = @transform_0, window_bounds = array<i64: 8, 128>}, {transform_indices = @transform_1, window_bounds = array<i64: 32>}, {transform_indices = @transform_2, window_bounds = array<i64: 8, 128>}]} {
    %c0 = arith.constant 0 : index
    %c0_0 = arith.constant 0 : index
    %0 = vector.load %arg1[%c0, %c0_0] : memref<8x128xi32, #tpu.memory_space<vmem>>, vector<8x128xi32>
    %c0_i32 = arith.constant 0 : i32
    %c31_i32 = arith.constant 31 : i32
    %1 = vector.broadcast %c0_i32 : i32 to vector<8x128xi32>
    %2 = arith.maxsi %1, %0 : vector<8x128xi32>
    %3 = vector.broadcast %c31_i32 : i32 to vector<8x128xi32>
    %4 = arith.minsi %3, %2 : vector<8x128xi32>
    %c1_i32 = arith.constant 1 : i32
    %5 = vector.broadcast %c1_i32 : i32 to vector<8x128xi32>
    %6 = arith.andi %4, %5 : vector<8x128xi32>
    %c0_i32_1 = arith.constant 0 : i32
    %7 = vector.broadcast %c0_i32_1 : i32 to vector<8x128xi32>
    %8 = arith.cmpi ne, %6, %7 : vector<8x128xi32>
    %c2_i32 = arith.constant 2 : i32
    %9 = vector.broadcast %c2_i32 : i32 to vector<8x128xi32>
    %10 = arith.andi %4, %9 : vector<8x128xi32>
    %c0_i32_2 = arith.constant 0 : i32
    %11 = vector.broadcast %c0_i32_2 : i32 to vector<8x128xi32>
    %12 = arith.cmpi ne, %10, %11 : vector<8x128xi32>
    %c4_i32 = arith.constant 4 : i32
    %13 = vector.broadcast %c4_i32 : i32 to vector<8x128xi32>
    %14 = arith.andi %4, %13 : vector<8x128xi32>
    %c0_i32_3 = arith.constant 0 : i32
    %15 = vector.broadcast %c0_i32_3 : i32 to vector<8x128xi32>
    %16 = arith.cmpi ne, %14, %15 : vector<8x128xi32>
    %c8_i32 = arith.constant 8 : i32
    %17 = vector.broadcast %c8_i32 : i32 to vector<8x128xi32>
    %18 = arith.andi %4, %17 : vector<8x128xi32>
    %c0_i32_4 = arith.constant 0 : i32
    %19 = vector.broadcast %c0_i32_4 : i32 to vector<8x128xi32>
    %20 = arith.cmpi ne, %18, %19 : vector<8x128xi32>
    %c16_i32 = arith.constant 16 : i32
    %21 = vector.broadcast %c16_i32 : i32 to vector<8x128xi32>
    %22 = arith.andi %4, %21 : vector<8x128xi32>
    %c0_i32_5 = arith.constant 0 : i32
    %23 = vector.broadcast %c0_i32_5 : i32 to vector<8x128xi32>
    %24 = arith.cmpi ne, %22, %23 : vector<8x128xi32>
    %c1 = arith.constant 1 : index
    %25 = memref.load %arg2[%c1] : memref<32xf32, #tpu.memory_space<smem>>
    %c0_6 = arith.constant 0 : index
    %26 = memref.load %arg2[%c0_6] : memref<32xf32, #tpu.memory_space<smem>>
    %27 = vector.broadcast %25 : f32 to vector<8x128xf32>
    %28 = vector.broadcast %26 : f32 to vector<8x128xf32>
    %29 = arith.select %8, %27, %28 : vector<8x128xi1>, vector<8x128xf32>
    %c3 = arith.constant 3 : index
    %30 = memref.load %arg2[%c3] : memref<32xf32, #tpu.memory_space<smem>>
    %c2 = arith.constant 2 : index
    %31 = memref.load %arg2[%c2] : memref<32xf32, #tpu.memory_space<smem>>
    %32 = vector.broadcast %30 : f32 to vector<8x128xf32>
    %33 = vector.broadcast %31 : f32 to vector<8x128xf32>
    %34 = arith.select %8, %32, %33 : vector<8x128xi1>, vector<8x128xf32>
    %35 = arith.select %12, %34, %29 : vector<8x128xi1>, vector<8x128xf32>
    %c5 = arith.constant 5 : index
    %36 = memref.load %arg2[%c5] : memref<32xf32, #tpu.memory_space<smem>>
    %c4 = arith.constant 4 : index
    %37 = memref.load %arg2[%c4] : memref<32xf32, #tpu.memory_space<smem>>
    %38 = vector.broadcast %36 : f32 to vector<8x128xf32>
    %39 = vector.broadcast %37 : f32 to vector<8x128xf32>
    %40 = arith.select %8, %38, %39 : vector<8x128xi1>, vector<8x128xf32>
    %c7 = arith.constant 7 : index
    %41 = memref.load %arg2[%c7] : memref<32xf32, #tpu.memory_space<smem>>
    %c6 = arith.constant 6 : index
    %42 = memref.load %arg2[%c6] : memref<32xf32, #tpu.memory_space<smem>>
    %43 = vector.broadcast %41 : f32 to vector<8x128xf32>
    %44 = vector.broadcast %42 : f32 to vector<8x128xf32>
    %45 = arith.select %8, %43, %44 : vector<8x128xi1>, vector<8x128xf32>
    %46 = arith.select %12, %45, %40 : vector<8x128xi1>, vector<8x128xf32>
    %47 = arith.select %16, %46, %35 : vector<8x128xi1>, vector<8x128xf32>
    %c9 = arith.constant 9 : index
    %48 = memref.load %arg2[%c9] : memref<32xf32, #tpu.memory_space<smem>>
    %c8 = arith.constant 8 : index
    %49 = memref.load %arg2[%c8] : memref<32xf32, #tpu.memory_space<smem>>
    %50 = vector.broadcast %48 : f32 to vector<8x128xf32>
    %51 = vector.broadcast %49 : f32 to vector<8x128xf32>
    %52 = arith.select %8, %50, %51 : vector<8x128xi1>, vector<8x128xf32>
    %c11 = arith.constant 11 : index
    %53 = memref.load %arg2[%c11] : memref<32xf32, #tpu.memory_space<smem>>
    %c10 = arith.constant 10 : index
    %54 = memref.load %arg2[%c10] : memref<32xf32, #tpu.memory_space<smem>>
    %55 = vector.broadcast %53 : f32 to vector<8x128xf32>
    %56 = vector.broadcast %54 : f32 to vector<8x128xf32>
    %57 = arith.select %8, %55, %56 : vector<8x128xi1>, vector<8x128xf32>
    %58 = arith.select %12, %57, %52 : vector<8x128xi1>, vector<8x128xf32>
    %c13 = arith.constant 13 : index
    %59 = memref.load %arg2[%c13] : memref<32xf32, #tpu.memory_space<smem>>
    %c12 = arith.constant 12 : index
    %60 = memref.load %arg2[%c12] : memref<32xf32, #tpu.memory_space<smem>>
    %61 = vector.broadcast %59 : f32 to vector<8x128xf32>
    %62 = vector.broadcast %60 : f32 to vector<8x128xf32>
    %63 = arith.select %8, %61, %62 : vector<8x128xi1>, vector<8x128xf32>
    %c15 = arith.constant 15 : index
    %64 = memref.load %arg2[%c15] : memref<32xf32, #tpu.memory_space<smem>>
    %c14 = arith.constant 14 : index
    %65 = memref.load %arg2[%c14] : memref<32xf32, #tpu.memory_space<smem>>
    %66 = vector.broadcast %64 : f32 to vector<8x128xf32>
    %67 = vector.broadcast %65 : f32 to vector<8x128xf32>
    %68 = arith.select %8, %66, %67 : vector<8x128xi1>, vector<8x128xf32>
    %69 = arith.select %12, %68, %63 : vector<8x128xi1>, vector<8x128xf32>
    %70 = arith.select %16, %69, %58 : vector<8x128xi1>, vector<8x128xf32>
    %71 = arith.select %20, %70, %47 : vector<8x128xi1>, vector<8x128xf32>
    %c17 = arith.constant 17 : index
    %72 = memref.load %arg2[%c17] : memref<32xf32, #tpu.memory_space<smem>>
    %c16 = arith.constant 16 : index
    %73 = memref.load %arg2[%c16] : memref<32xf32, #tpu.memory_space<smem>>
    %74 = vector.broadcast %72 : f32 to vector<8x128xf32>
    %75 = vector.broadcast %73 : f32 to vector<8x128xf32>
    %76 = arith.select %8, %74, %75 : vector<8x128xi1>, vector<8x128xf32>
    %c19 = arith.constant 19 : index
    %77 = memref.load %arg2[%c19] : memref<32xf32, #tpu.memory_space<smem>>
    %c18 = arith.constant 18 : index
    %78 = memref.load %arg2[%c18] : memref<32xf32, #tpu.memory_space<smem>>
    %79 = vector.broadcast %77 : f32 to vector<8x128xf32>
    %80 = vector.broadcast %78 : f32 to vector<8x128xf32>
    %81 = arith.select %8, %79, %80 : vector<8x128xi1>, vector<8x128xf32>
    %82 = arith.select %12, %81, %76 : vector<8x128xi1>, vector<8x128xf32>
    %c21 = arith.constant 21 : index
    %83 = memref.load %arg2[%c21] : memref<32xf32, #tpu.memory_space<smem>>
    %c20 = arith.constant 20 : index
    %84 = memref.load %arg2[%c20] : memref<32xf32, #tpu.memory_space<smem>>
    %85 = vector.broadcast %83 : f32 to vector<8x128xf32>
    %86 = vector.broadcast %84 : f32 to vector<8x128xf32>
    %87 = arith.select %8, %85, %86 : vector<8x128xi1>, vector<8x128xf32>
    %c23 = arith.constant 23 : index
    %88 = memref.load %arg2[%c23] : memref<32xf32, #tpu.memory_space<smem>>
    %c22 = arith.constant 22 : index
    %89 = memref.load %arg2[%c22] : memref<32xf32, #tpu.memory_space<smem>>
    %90 = vector.broadcast %88 : f32 to vector<8x128xf32>
    %91 = vector.broadcast %89 : f32 to vector<8x128xf32>
    %92 = arith.select %8, %90, %91 : vector<8x128xi1>, vector<8x128xf32>
    %93 = arith.select %12, %92, %87 : vector<8x128xi1>, vector<8x128xf32>
    %94 = arith.select %16, %93, %82 : vector<8x128xi1>, vector<8x128xf32>
    %c25 = arith.constant 25 : index
    %95 = memref.load %arg2[%c25] : memref<32xf32, #tpu.memory_space<smem>>
    %c24 = arith.constant 24 : index
    %96 = memref.load %arg2[%c24] : memref<32xf32, #tpu.memory_space<smem>>
    %97 = vector.broadcast %95 : f32 to vector<8x128xf32>
    %98 = vector.broadcast %96 : f32 to vector<8x128xf32>
    %99 = arith.select %8, %97, %98 : vector<8x128xi1>, vector<8x128xf32>
    %c27 = arith.constant 27 : index
    %100 = memref.load %arg2[%c27] : memref<32xf32, #tpu.memory_space<smem>>
    %c26 = arith.constant 26 : index
    %101 = memref.load %arg2[%c26] : memref<32xf32, #tpu.memory_space<smem>>
    %102 = vector.broadcast %100 : f32 to vector<8x128xf32>
    %103 = vector.broadcast %101 : f32 to vector<8x128xf32>
    %104 = arith.select %8, %102, %103 : vector<8x128xi1>, vector<8x128xf32>
    %105 = arith.select %12, %104, %99 : vector<8x128xi1>, vector<8x128xf32>
    %c29 = arith.constant 29 : index
    %106 = memref.load %arg2[%c29] : memref<32xf32, #tpu.memory_space<smem>>
    %c28 = arith.constant 28 : index
    %107 = memref.load %arg2[%c28] : memref<32xf32, #tpu.memory_space<smem>>
    %108 = vector.broadcast %106 : f32 to vector<8x128xf32>
    %109 = vector.broadcast %107 : f32 to vector<8x128xf32>
    %110 = arith.select %8, %108, %109 : vector<8x128xi1>, vector<8x128xf32>
    %c31 = arith.constant 31 : index
    %111 = memref.load %arg2[%c31] : memref<32xf32, #tpu.memory_space<smem>>
    %c30 = arith.constant 30 : index
    %112 = memref.load %arg2[%c30] : memref<32xf32, #tpu.memory_space<smem>>
    %113 = vector.broadcast %111 : f32 to vector<8x128xf32>
    %114 = vector.broadcast %112 : f32 to vector<8x128xf32>
    %115 = arith.select %8, %113, %114 : vector<8x128xi1>, vector<8x128xf32>
    %116 = arith.select %12, %115, %110 : vector<8x128xi1>, vector<8x128xf32>
    %117 = arith.select %16, %116, %105 : vector<8x128xi1>, vector<8x128xf32>
    %118 = arith.select %20, %117, %94 : vector<8x128xi1>, vector<8x128xf32>
    %119 = arith.select %24, %118, %71 : vector<8x128xi1>, vector<8x128xf32>
    %c0_7 = arith.constant 0 : index
    %c0_8 = arith.constant 0 : index
    %120 = vector.load %arg3[%c0_7, %c0_8] : memref<8x128xf32, #tpu.memory_space<vmem>>, vector<8x128xf32>
    tpu.vector_store %arg3[%c0_7, %c0_8], %119 {strides = array<i32>} : memref<8x128xf32, #tpu.memory_space<vmem>>, vector<8x128xf32>,
    return
  }
  func.func @transform_0(%arg0: i32) -> (i32, i32) {
    %c0_i32 = arith.constant 0 : i32
    %c0_i32_0 = arith.constant 0 : i32
    return %arg0, %c0_i32 : i32, i32
  }
  func.func @transform_1(%arg0: i32) -> i32 {
    %c0_i32 = arith.constant 0 : i32
    %c0_i32_0 = arith.constant 0 : i32
    return %c0_i32 : i32
  }
  func.func @transform_2(%arg0: i32) -> (i32, i32) {
    %c0_i32 = arith.constant 0 : i32
    %c0_i32_0 = arith.constant 0 : i32
    return %arg0, %c0_i32 : i32, i32
  }
}

</mosaic_0001>

<llo_original>
// kernel: tpu_custom_call.1
$region0: #{tpu_custom_call.1}
  #allocation0 [shape = 'u32[]', space=smem, size = 0x4, offset = 0x4, fixed_abs, tag = 'smem constant byte address 0x4 - core index']
  #allocation1 [shape = 'u32[144,128]{1,0:T(1,128)}', space=vmem, size = 0x12000, scoped, tag = 'internal scratch']
  %s0 = inlined_call_operand.hbm [shape: s32[8,128], index: 0, kind: input, shape index: {}]
  %s1 = inlined_call_operand.vmem [shape: f32[32], index: 1, kind: input, shape index: {}]
  %s2 = inlined_call_operand.hbm [shape: f32[8,128], index: 2, kind: output, shape index: {}]
  %s3 = sld [smem:[#allocation0]]
  $region26: #{tpu_custom_call.1} parent=0
    _
  %s5 = ssub.s32 1, %s3
  %s6 = scalar_select 0, %s5, %s3
  $region1: #{tpu_custom_call.1} parent=0
    #allocation2 [shape = 'u8[4096]{0}', space=vmem, size = 0x1000, scoped, tag = 'input window, operand 0, single buffered']
    #allocation3 [shape = 's32[1]{0}', space=sflag, size = 0x4, scoped, tag = 'scoped memory for tpu_custom_call.1']
    #allocation4 [shape = 's32[1]{0}', space=sflag, size = 0x4, scoped, tag = 'scoped memory for tpu_custom_call.1']
    #allocation5 [shape = 's32[1]{0}', space=sflag, size = 0x4, scoped, tag = 'scoped memory for tpu_custom_call.1']
    #allocation6 [shape = 'u8[512]{0}', space=smem, size = 0x200, scoped, tag = 'input window, operand 1, single buffered']
    #allocation7 [shape = 'u8[4096]{0}', space=vmem, size = 0x1000, scoped, tag = 'output window, operand 0, single buffered']
    %7 = vsyncpa [#allocation3], 0
    %8 = vsyncpa [#allocation5], 0
    %9 = vsyncpa [#allocation4], 0
    // Predicated region
    $region2: #{tpu_custom_call.1} parent=1 // pred_check
      _
    $region3: #{tpu_custom_call.1} parent=1 // pred_check_branch
      %11 = sbr.rel (0) target = $region5
    $region4: #{tpu_custom_call.1} parent=1 // pred_region
      %s13 = ssub.s32 128, 128
      %14 = vsyncadd [#allocation3], %s13
      %s16 = sshll.u32 [#allocation2], 4
      %s17 = int_to_ptr.vmem [resolvable:$true] %s16
      %19 = dma.hbm_to_vmem [thread:$0]  %s0, 128, %s17, [#allocation3]
    $region5: #{tpu_custom_call.1} parent=1 // pred_fallthru
      _
    // Predicated region
    $region6: #{tpu_custom_call.1} parent=1 // pred_check
      _
    $region7: #{tpu_custom_call.1} parent=1 // pred_check_branch
      %21 = sbr.rel (0) target = $region9
    $region8: #{tpu_custom_call.1} parent=1 // pred_region
      %s23 = ssub.s32 16, 16
      %24 = vsyncadd [#allocation5], %s23
      %s26 = sshll.u32 %s1, 4
      %s27 = int_to_ptr.vmem [resolvable:$true] %s26
      %29 = dma.vmem_to_smem %s27, 16, [#allocation6], [#allocation5]
    $region9: #{tpu_custom_call.1} parent=1 // pred_fallthru
      _
    // Predicated region
    $region10: #{tpu_custom_call.1} parent=1 // pred_check
      _
    $region11: #{tpu_custom_call.1} parent=1 // pred_check_branch
      %31 = sbr.rel (0) target = $region13
    $region12: #{tpu_custom_call.1} parent=1 // pred_region
      %32 = dma.done [#allocation3], 128
    $region13: #{tpu_custom_call.1} parent=1 // pred_fallthru
      _
    // Predicated region
    $region14: #{tpu_custom_call.1} parent=1 // pred_check
      _
    $region15: #{tpu_custom_call.1} parent=1 // pred_check_branch
      %34 = sbr.rel (0) target = $region17
    $region16: #{tpu_custom_call.1} parent=1 // pred_region
      %35 = dma.done [#allocation5], 16
    $region17: #{tpu_custom_call.1} parent=1 // pred_fallthru
      _
    %36 = sfence
    %v37 = vld [vmem:[#allocation2] sm:$0xff]
    %vm38 = vcmp.gt.s32.totalorder %v37, 0
    %v39 = vsel %vm38, %v37, 0
    %vm40 = vcmp.lt.s32.totalorder %v39, 31
    %v41 = vsel %vm40, %v39, 31
    %v42 = vand.u32 %v41, 1
    %vm43 = vcmp.ne.s32.totalorder %v42, 0
    %v44 = vand.u32 %v41, 2
    %vm45 = vcmp.ne.s32.totalorder %v44, 0
    %v46 = vand.u32 %v41, 4
    %vm47 = vcmp.ne.s32.totalorder %v46, 0
    %v48 = vand.u32 %v41, 8
    %vm49 = vcmp.ne.s32.totalorder %v48, 0
    %v50 = vand.u32 %v41, 16
    %vm51 = vcmp.ne.s32.totalorder %v50, 0
    %s52 = sld [smem:[#allocation6 + $0x1]]
    %s53 = sld [smem:[#allocation6]]
    %v54 = vstv %s52
    %v55 = vstv %s53
    %v56 = vsel %vm43, %v54, %v55
    %s57 = sld [smem:[#allocation6 + $0x3]]
    %s58 = sld [smem:[#allocation6 + $0x2]]
    %v59 = vstv %s57
    %v60 = vstv %s58
    %v61 = vsel %vm43, %v59, %v60
    %v62 = vsel %vm45, %v61, %v56
    %s63 = sld [smem:[#allocation6 + $0x5]]
    %s64 = sld [smem:[#allocation6 + $0x4]]
    %v65 = vstv %s63
    %v66 = vstv %s64
    %v67 = vsel %vm43, %v65, %v66
    %s68 = sld [smem:[#allocation6 + $0x7]]
    %s69 = sld [smem:[#allocation6 + $0x6]]
    %v70 = vstv %s68
    %v71 = vstv %s69
    %v72 = vsel %vm43, %v70, %v71
    %v73 = vsel %vm45, %v72, %v67
    %v74 = vsel %vm47, %v73, %v62
    %s75 = sld [smem:[#allocation6 + $0x9]]
    %s76 = sld [smem:[#allocation6 + $0x8]]
    %v77 = vstv %s75
    %v78 = vstv %s76
    %v79 = vsel %vm43, %v77, %v78
    %s80 = sld [smem:[#allocation6 + $0xb]]
    %s81 = sld [smem:[#allocation6 + $0xa]]
    %v82 = vstv %s80
    %v83 = vstv %s81
    %v84 = vsel %vm43, %v82, %v83
    %v85 = vsel %vm45, %v84, %v79
    %s86 = sld [smem:[#allocation6 + $0xd]]
    %s87 = sld [smem:[#allocation6 + $0xc]]
    %v88 = vstv %s86
    %v89 = vstv %s87
    %v90 = vsel %vm43, %v88, %v89
    %s91 = sld [smem:[#allocation6 + $0xf]]
    %s92 = sld [smem:[#allocation6 + $0xe]]
    %v93 = vstv %s91
    %v94 = vstv %s92
    %v95 = vsel %vm43, %v93, %v94
    %v96 = vsel %vm45, %v95, %v90
    %v97 = vsel %vm47, %v96, %v85
    %v98 = vsel %vm49, %v97, %v74
    %s99 = sld [smem:[#allocation6 + $0x11]]
    %s100 = sld [smem:[#allocation6 + $0x10]]
    %v101 = vstv %s99
    %v102 = vstv %s100
    %v103 = vsel %vm43, %v101, %v102
    %s104 = sld [smem:[#allocation6 + $0x13]]
    %s105 = sld [smem:[#allocation6 + $0x12]]
    %v106 = vstv %s104
    %v107 = vstv %s105
    %v108 = vsel %vm43, %v106, %v107
    %v109 = vsel %vm45, %v108, %v103
    %s110 = sld [smem:[#allocation6 + $0x15]]
    %s111 = sld [smem:[#allocation6 + $0x14]]
    %v112 = vstv %s110
    %v113 = vstv %s111
    %v114 = vsel %vm43, %v112, %v113
    %s115 = sld [smem:[#allocation6 + $0x17]]
    %s116 = sld [smem:[#allocation6 + $0x16]]
    %v117 = vstv %s115
    %v118 = vstv %s116
    %v119 = vsel %vm43, %v117, %v118
    %v120 = vsel %vm45, %v119, %v114
    %v121 = vsel %vm47, %v120, %v109
    %s122 = sld [smem:[#allocation6 + $0x19]]
    %s123 = sld [smem:[#allocation6 + $0x18]]
    %v124 = vstv %s122
    %v125 = vstv %s123
    %v126 = vsel %vm43, %v124, %v125
    %s127 = sld [smem:[#allocation6 + $0x1b]]
    %s128 = sld [smem:[#allocation6 + $0x1a]]
    %v129 = vstv %s127
    %v130 = vstv %s128
    %v131 = vsel %vm43, %v129, %v130
    %v132 = vsel %vm45, %v131, %v126
    %s133 = sld [smem:[#allocation6 + $0x1d]]
    %s134 = sld [smem:[#allocation6 + $0x1c]]
    %v135 = vstv %s133
    %v136 = vstv %s134
    %v137 = vsel %vm43, %v135, %v136
    %s138 = sld [smem:[#allocation6 + $0x1f]]
    %s139 = sld [smem:[#allocation6 + $0x1e]]
    %v140 = vstv %s138
    %v141 = vstv %s139
    %v142 = vsel %vm43, %v140, %v141
    %v143 = vsel %vm45, %v142, %v137
    %v144 = vsel %vm47, %v143, %v132
    %v145 = vsel %vm49, %v144, %v121
    %v146 = vsel %vm51, %v145, %v98
    %147 = vst [vmem:[#allocation7] sm:$0xff] %v146
    // Predicated region
    $region18: #{tpu_custom_call.1} parent=1 // pred_check
      _
    $region19: #{tpu_custom_call.1} parent=1 // pred_check_branch
      %149 = sbr.rel (0) target = $region21
    $region20: #{tpu_custom_call.1} parent=1 // pred_region
      %s151 = ssub.s32 128, 128
      %152 = vsyncadd [#allocation4], %s151
      %s154 = sshll.u32 [#allocation7], 4
      %s155 = int_to_ptr.vmem [resolvable:$true] %s154
      %157 = dma.vmem_to_hbm [thread:$0]  %s155, 128, %s2, [#allocation4]
    $region21: #{tpu_custom_call.1} parent=1 // pred_fallthru
      _
    // Predicated region
    $region22: #{tpu_custom_call.1} parent=1 // pred_check
      _
    $region23: #{tpu_custom_call.1} parent=1 // pred_check_branch
      %159 = sbr.rel (0) target = $region25
    $region24: #{tpu_custom_call.1} parent=1 // pred_region
      %160 = dma.done [#allocation4], 128
    $region25: #{tpu_custom_call.1} parent=1 // pred_fallthru
      _
    %161 = vsyncpa [#allocation3], 1
    %162 = vsyncpa [#allocation4], 1
    %163 = vsyncpa [#allocation5], 1

</llo_original>
